<compile_context>
chip_gen: v6e
topology: v6e:2x2x1
jax: 0.10.0
libtpu: 0.0.40
codegen_flags: <defaults>
</compile_context>

<pallas_src>
import jax
import jax.numpy as jnp
from jax.experimental import pallas as pl
from jax.experimental.pallas import tpu as pltpu

NUM_CLASSES = 10
IN_DIM = 784          # full-K block (equals full array dim, so non-128-multiple is legal)
HID_DIM = 128
OUT_PAD = 128         # lane-dense padded output width; real logits live in [:, :NUM_CLASSES]


def mlp_kernel(x_ref, w1_ref, b1_ref, w2_ref, b2_ref, w3_ref, b3_ref, o_ref):
    # In-kernel cast: x arrives as f32 (no extra wrapper pass), bf16 feeds the MXU.
    x = x_ref[...].astype(jnp.bfloat16)
    # Layer 1: Linear(784 -> 128) + ReLU  (bf16 MXU matmul, f32 accumulate)
    h1 = jnp.dot(x, w1_ref[...], preferred_element_type=jnp.float32)
    h1 = jnp.maximum(h1 + b1_ref[...], 0.0)
    # Layer 2: Linear(128 -> 128) + ReLU
    h2 = jnp.dot(h1.astype(jnp.bfloat16), w2_ref[...], preferred_element_type=jnp.float32)
    h2 = jnp.maximum(h2 + b2_ref[...], 0.0)
    # Layer 3: Linear(128 -> 10) into a lane-dense 128-wide padded output block (bf16 store).
    out = jnp.dot(h2.astype(jnp.bfloat16), w3_ref[...], preferred_element_type=jnp.float32)
    o_ref[...] = (out + b3_ref[...]).astype(o_ref.dtype)


def _round_up(n, m):
    return ((n + m - 1) // m) * m


def three_layer_net(x, w1, b1, w2, b2, w3, b3, *, bm=1024):
    """x: (B, 784) f32. Weights in (in, out) layout. Returns (B, 10) f32 logits."""
    B = x.shape[0]
    B8 = _round_up(B, 8)

    # Effective batch tile: multiple of 8, no larger than the padded batch, and capped so the
    # grid has >= 2 steps whenever possible (keeps both v7x TensorCores busy; the extra grid
    # step is ~0.35 us of overhead on single-TC chips — negligible).
    two_step_cap = max(8, _round_up(-(-B8 // 2), 8))
    bm_eff = max(8, min(bm, B8, two_step_cap))
    bm_eff = (bm_eff // 8) * 8
    B_pad = _round_up(B, bm_eff)
    grid = (B_pad // bm_eff,)

    # ---- wrapper-side layout plumbing (all zero padding is numerically inert) ----
    # x: only batch rows are padded (no feature pad, no dtype cast — the kernel casts).
    x_p = x if B_pad == B else jnp.pad(x, ((0, B_pad - B), (0, 0)))
    w1_b = w1.astype(jnp.bfloat16)
    w2_b = w2.astype(jnp.bfloat16)
    # W3 / b3: pad N 10 -> 128 with zero columns so the output store is lane-dense.
    w3_b = jnp.pad(w3, ((0, 0), (0, OUT_PAD - NUM_CLASSES))).astype(jnp.bfloat16)
    b3_p = jnp.pad(b3, (0, OUT_PAD - NUM_CLASSES)).reshape(1, OUT_PAD).astype(jnp.float32)
    b1r = b1.reshape(1, HID_DIM).astype(jnp.float32)
    b2r = b2.reshape(1, HID_DIM).astype(jnp.float32)

    out_pad = pl.pallas_call(
        mlp_kernel,
        out_shape=jax.ShapeDtypeStruct((B_pad, OUT_PAD), jnp.bfloat16),
        grid=grid,
        in_specs=[
            pl.BlockSpec((bm_eff, IN_DIM), lambda i: (i, 0)),        # x tile, f32 (per-step DMA)
            pl.BlockSpec((IN_DIM, HID_DIM), lambda i: (0, 0)),       # W1 (resident)
            pl.BlockSpec((1, HID_DIM), lambda i: (0, 0)),            # b1
            pl.BlockSpec((HID_DIM, HID_DIM), lambda i: (0, 0)),      # W2 (resident)
            pl.BlockSpec((1, HID_DIM), lambda i: (0, 0)),            # b2
            pl.BlockSpec((HID_DIM, OUT_PAD), lambda i: (0, 0)),      # W3 (padded, resident)
            pl.BlockSpec((1, OUT_PAD), lambda i: (0, 0)),            # b3 (padded)
        ],
        out_specs=pl.BlockSpec((bm_eff, OUT_PAD), lambda i: (i, 0)),
        compiler_params=pltpu.CompilerParams(
            dimension_semantics=("parallel",)),
    )(x_p, w1_b, b1r, w2_b, b2r, w3_b, b3_p)

    # Slice away batch padding and padded logit lanes; upcast to f32 for the consumer.
    return out_pad[:B, :NUM_CLASSES].astype(jnp.float32)


def init_params(key):
    """Matches ThreeLayerNet.init_weights: W ~ N(0, 1/sqrt(fan_in)), b = 0.
    PyTorch stores weights (out, in); we generate (out, in) then transpose to (in, out)."""
    k1, k2, k3 = jax.random.split(key, 3)
    w1_t = jax.random.normal(k1, (HID_DIM, IN_DIM), jnp.float32) * (1.0 / jnp.sqrt(IN_DIM))
    w2_t = jax.random.normal(k2, (HID_DIM, HID_DIM), jnp.float32) * (1.0 / jnp.sqrt(HID_DIM))
    w3_t = jax.random.normal(k3, (NUM_CLASSES, HID_DIM), jnp.float32) * (1.0 / jnp.sqrt(HID_DIM))
    b1 = jnp.zeros((HID_DIM,), jnp.float32)
    b2 = jnp.zeros((HID_DIM,), jnp.float32)
    b3 = jnp.zeros((NUM_CLASSES,), jnp.float32)
    return w1_t.T, b1, w2_t.T, b2, w3_t.T, b3


def reference_forward_bf16(x, w1, b1, w2, b2, w3, b3):
    """Pure-JAX reference with the same bf16-compute / f32-accumulate recipe."""
    xb = x.astype(jnp.bfloat16)
    w1b, w2b, w3b = (w.astype(jnp.bfloat16) for w in (w1, w2, w3))
    h1 = jnp.maximum(jnp.dot(xb, w1b, preferred_element_type=jnp.float32) + b1, 0.0)
    h2 = jnp.maximum(
        jnp.dot(h1.astype(jnp.bfloat16), w2b, preferred_element_type=jnp.float32) + b2, 0.0)
    return jnp.dot(h2.astype(jnp.bfloat16), w3b, preferred_element_type=jnp.float32) + b3


if __name__ == "__main__":
    key = jax.random.PRNGKey(0)
    kx, kp = jax.random.split(key)

    B = 20  # deliberately NOT a multiple of the tile: exercises batch padding + >=2 grid steps
    x = jax.random.normal(kx, (B, IN_DIM), jnp.float32)
    params = init_params(kp)

    # Default (production) tile — clamped/capped, 2 grid steps at this tiny batch.
    out = jax.block_until_ready(three_layer_net(x, *params))
    # Small explicit tile — exercises a longer multi-step grid over the same inputs.
    out_small = jax.block_until_ready(three_layer_net(x, *params, bm=8))

    ref = reference_forward_bf16(x, *params)
    assert out.shape == (B, NUM_CLASSES)
    assert out_small.shape == (B, NUM_CLASSES)
    # Kernel output is bf16-rounded; compare against f32-accumulated bf16 reference.
    assert jnp.allclose(out, ref, atol=2e-2, rtol=2e-2), "mismatch vs bf16 reference"
    assert jnp.allclose(out_small, ref, atol=2e-2, rtol=2e-2), "mismatch vs bf16 reference (bm=8)"
    assert jnp.allclose(out, out_small, atol=1e-3, rtol=1e-3), "tile-size dependence"

    print("KERNEL_OK")
</pallas_src>

<mosaic_0001>
module attributes {stable_mosaic.version = 11 : i64} {
  func.func @mlp_kernel(%arg0: i32, %arg1: memref<16x784xf32, #tpu.memory_space<vmem>>, %arg2: memref<784x128xbf16, #tpu.memory_space<vmem>>, %arg3: memref<1x128xf32, #tpu.memory_space<vmem>>, %arg4: memref<128x128xbf16, #tpu.memory_space<vmem>>, %arg5: memref<1x128xf32, #tpu.memory_space<vmem>>, %arg6: memref<128x128xbf16, #tpu.memory_space<vmem>>, %arg7: memref<1x128xf32, #tpu.memory_space<vmem>>, %arg8: memref<16x128xbf16, #tpu.memory_space<vmem>>) attributes {dimension_semantics = [#tpu.dimension_semantics<parallel>], iteration_bounds = array<i64: 2>, scalar_prefetch = 0 : i64, scratch_operands = 0 : i64, tpu.core_type = #tpu.core_type<tc>, window_params = [{transform_indices = @transform_0, window_bounds = array<i64: 16, 784>}, {pipeline_mode = #tpu.pipeline_mode<synchronous>, transform_indices = @transform_1, window_bounds = array<i64: 784, 128>}, {pipeline_mode = #tpu.pipeline_mode<synchronous>, transform_indices = @transform_2, window_bounds = array<i64: 1, 128>}, {pipeline_mode = #tpu.pipeline_mode<synchronous>, transform_indices = @transform_3, window_bounds = array<i64: 128, 128>}, {pipeline_mode = #tpu.pipeline_mode<synchronous>, transform_indices = @transform_4, window_bounds = array<i64: 1, 128>}, {pipeline_mode = #tpu.pipeline_mode<synchronous>, transform_indices = @transform_5, window_bounds = array<i64: 128, 128>}, {pipeline_mode = #tpu.pipeline_mode<synchronous>, transform_indices = @transform_6, window_bounds = array<i64: 1, 128>}, {transform_indices = @transform_7, window_bounds = array<i64: 16, 128>}]} {
    %c0 = arith.constant 0 : index
    %c0_0 = arith.constant 0 : index
    %0 = vector.load %arg1[%c0, %c0_0] : memref<16x784xf32, #tpu.memory_space<vmem>>, vector<16x784xf32>
    %1 = arith.truncf %0 : vector<16x784xf32> to vector<16x784xbf16>
    %c0_1 = arith.constant 0 : index
    %c0_2 = arith.constant 0 : index
    %2 = vector.load %arg2[%c0_1, %c0_2] : memref<784x128xbf16, #tpu.memory_space<vmem>>, vector<784x128xbf16>
    %cst = arith.constant dense<0.000000e+00> : vector<16x128xf32>
    %3 = tpu.matmul %1, %2, %cst {dimension_numbers = #tpu.dot_dimension_numbers<[1], [0], [0], [1], [0, 0, 1, 1], [], []>} : vector<16x784xbf16>, vector<784x128xbf16>, vector<16x128xf32> -> vector<16x128xf32>
    %c0_3 = arith.constant 0 : index
    %c0_4 = arith.constant 0 : index
    %4 = vector.load %arg3[%c0_3, %c0_4] : memref<1x128xf32, #tpu.memory_space<vmem>>, vector<1x128xf32>
    %5 = vector.broadcast %4 : vector<1x128xf32> to vector<16x128xf32>
    %6 = arith.addf %3, %5 : vector<16x128xf32>
    %cst_5 = arith.constant 0.000000e+00 : f32
    %7 = vector.broadcast %cst_5 : f32 to vector<16x128xf32>
    %8 = arith.maximumf %6, %7 : vector<16x128xf32>
    %9 = arith.truncf %8 : vector<16x128xf32> to vector<16x128xbf16>
    %c0_6 = arith.constant 0 : index
    %c0_7 = arith.constant 0 : index
    %10 = vector.load %arg4[%c0_6, %c0_7] : memref<128x128xbf16, #tpu.memory_space<vmem>>, vector<128x128xbf16>
    %cst_8 = arith.constant dense<0.000000e+00> : vector<16x128xf32>
    %11 = tpu.matmul %9, %10, %cst_8 {dimension_numbers = #tpu.dot_dimension_numbers<[1], [0], [0], [1], [0, 0, 1, 1], [], []>} : vector<16x128xbf16>, vector<128x128xbf16>, vector<16x128xf32> -> vector<16x128xf32>
    %c0_9 = arith.constant 0 : index
    %c0_10 = arith.constant 0 : index
    %12 = vector.load %arg5[%c0_9, %c0_10] : memref<1x128xf32, #tpu.memory_space<vmem>>, vector<1x128xf32>
    %13 = vector.broadcast %12 : vector<1x128xf32> to vector<16x128xf32>
    %14 = arith.addf %11, %13 : vector<16x128xf32>
    %cst_11 = arith.constant 0.000000e+00 : f32
    %15 = vector.broadcast %cst_11 : f32 to vector<16x128xf32>
    %16 = arith.maximumf %14, %15 : vector<16x128xf32>
    %17 = arith.truncf %16 : vector<16x128xf32> to vector<16x128xbf16>
    %c0_12 = arith.constant 0 : index
    %c0_13 = arith.constant 0 : index
    %18 = vector.load %arg6[%c0_12, %c0_13] : memref<128x128xbf16, #tpu.memory_space<vmem>>, vector<128x128xbf16>
    %cst_14 = arith.constant dense<0.000000e+00> : vector<16x128xf32>
    %19 = tpu.matmul %17, %18, %cst_14 {dimension_numbers = #tpu.dot_dimension_numbers<[1], [0], [0], [1], [0, 0, 1, 1], [], []>} : vector<16x128xbf16>, vector<128x128xbf16>, vector<16x128xf32> -> vector<16x128xf32>
    %c0_15 = arith.constant 0 : index
    %c0_16 = arith.constant 0 : index
    %20 = vector.load %arg7[%c0_15, %c0_16] : memref<1x128xf32, #tpu.memory_space<vmem>>, vector<1x128xf32>
    %21 = vector.broadcast %20 : vector<1x128xf32> to vector<16x128xf32>
    %22 = arith.addf %19, %21 : vector<16x128xf32>
    %23 = arith.truncf %22 : vector<16x128xf32> to vector<16x128xbf16>
    %c0_17 = arith.constant 0 : index
    %c0_18 = arith.constant 0 : index
    %24 = vector.load %arg8[%c0_17, %c0_18] : memref<16x128xbf16, #tpu.memory_space<vmem>>, vector<16x128xbf16>
    tpu.vector_store %arg8[%c0_17, %c0_18], %23 {strides = array<i32>} : memref<16x128xbf16, #tpu.memory_space<vmem>>, vector<16x128xbf16>,
    return
  }
  func.func @transform_0(%arg0: i32) -> (i32, i32) {
    %c0_i32 = arith.constant 0 : i32
    %c0_i32_0 = arith.constant 0 : i32
    return %arg0, %c0_i32 : i32, i32
  }
  func.func @transform_1(%arg0: i32) -> (i32, i32) {
    %c0_i32 = arith.constant 0 : i32
    %c0_i32_0 = arith.constant 0 : i32
    %c0_i32_1 = arith.constant 0 : i32
    return %c0_i32, %c0_i32_0 : i32, i32
  }
  func.func @transform_2(%arg0: i32) -> (i32, i32) {
    %c0_i32 = arith.constant 0 : i32
    %c0_i32_0 = arith.constant 0 : i32
    %c0_i32_1 = arith.constant 0 : i32
    return %c0_i32, %c0_i32_0 : i32, i32
  }
  func.func @transform_3(%arg0: i32) -> (i32, i32) {
    %c0_i32 = arith.constant 0 : i32
    %c0_i32_0 = arith.constant 0 : i32
    %c0_i32_1 = arith.constant 0 : i32
    return %c0_i32, %c0_i32_0 : i32, i32
  }
  func.func @transform_4(%arg0: i32) -> (i32, i32) {
    %c0_i32 = arith.constant 0 : i32
    %c0_i32_0 = arith.constant 0 : i32
    %c0_i32_1 = arith.constant 0 : i32
    return %c0_i32, %c0_i32_0 : i32, i32
  }
  func.func @transform_5(%arg0: i32) -> (i32, i32) {
    %c0_i32 = arith.constant 0 : i32
    %c0_i32_0 = arith.constant 0 : i32
    %c0_i32_1 = arith.constant 0 : i32
    return %c0_i32, %c0_i32_0 : i32, i32
  }
  func.func @transform_6(%arg0: i32) -> (i32, i32) {
    %c0_i32 = arith.constant 0 : i32
    %c0_i32_0 = arith.constant 0 : i32
    %c0_i32_1 = arith.constant 0 : i32
    return %c0_i32, %c0_i32_0 : i32, i32
  }
  func.func @transform_7(%arg0: i32) -> (i32, i32) {
    %c0_i32 = arith.constant 0 : i32
    %c0_i32_0 = arith.constant 0 : i32
    return %arg0, %c0_i32 : i32, i32
  }
}

</mosaic_0001>

<llo_original>
// kernel: tpu_custom_call.1
$region0: #{tpu_custom_call.1}
  #allocation0 [shape = 'u32[]', space=smem, size = 0x4, offset = 0x4, fixed_abs, tag = 'smem constant byte address 0x4 - core index']
  #allocation1 [shape = 'u32[144,128]{1,0:T(1,128)}', space=vmem, size = 0x12000, scoped, tag = 'internal scratch']
  %s0 = inlined_call_operand.hbm [shape: f32[32,784], index: 0, kind: input, shape index: {}]
  %s1 = inlined_call_operand.hbm [shape: bf16[784,128], index: 1, kind: input, shape index: {}]
  %s2 = inlined_call_operand.vmem [shape: f32[1,128], index: 2, kind: input, shape index: {}]
  %s3 = inlined_call_operand.hbm [shape: bf16[128,128], index: 3, kind: input, shape index: {}]
  %s4 = inlined_call_operand.vmem [shape: f32[1,128], index: 4, kind: input, shape index: {}]
  %s5 = inlined_call_operand.hbm [shape: bf16[128,128], index: 5, kind: input, shape index: {}]
  %s6 = inlined_call_operand.vmem [shape: f32[1,128], index: 6, kind: input, shape index: {}]
  %s7 = inlined_call_operand.hbm [shape: bf16[32,128], index: 7, kind: output, shape index: {}]
  %s8 = sld [smem:[#allocation0]]
  $region77: #{tpu_custom_call.1} parent=0
    _
  %s10 = ssub.s32 1, %s8
  %s11 = scalar_select 0, %s10, %s8
  $region1: #{tpu_custom_call.1} parent=0
    #allocation2 [shape = 'u8[114688]{0}', space=vmem, size = 0x1c000, scoped, tag = 'input window, operand 0']
    #allocation3 [shape = 's32[2]{0}', space=sflag, size = 0x8, scoped, tag = 'scoped memory for tpu_custom_call.1']
    #allocation4 [shape = 's32[2]{0}', space=sflag, size = 0x8, scoped, tag = 'scoped memory for tpu_custom_call.1']
    #allocation5 [shape = 'u8[200704]{0}', space=vmem, size = 0x31000, scoped, tag = 'input window, operand 1, single buffered']
    #allocation6 [shape = 's32[1]{0}', space=sflag, size = 0x4, scoped, tag = 'scoped memory for tpu_custom_call.1']
    #allocation7 [shape = 'u8[32768]{0}', space=vmem, size = 0x8000, scoped, tag = 'input window, operand 3, single buffered']
    #allocation8 [shape = 'u8[32768]{0}', space=vmem, size = 0x8000, scoped, tag = 'input window, operand 5, single buffered']
    #allocation9 [shape = 's32[1]{0}', space=sflag, size = 0x4, scoped, tag = 'scoped memory for tpu_custom_call.1']
    #allocation10 [shape = 'u8[8192]{0}', space=vmem, size = 0x2000, scoped, tag = 'output window, operand 0']
    %12 = vsyncpa [#allocation3], 0
    %s13 = scalar_lea.sflag [#allocation3], 1
    %14 = vsyncpa %s13, 0
    %15 = vsyncpa [#allocation6], 0
    %16 = vsyncpa [#allocation9], 0
    %17 = vsyncpa [#allocation4], 0
    %s18 = scalar_lea.sflag [#allocation4], 1
    %19 = vsyncpa %s18, 0
    loop: start=0, step=1, limit=4
    $region2: #{tpu_custom_call.1} parent=1 // loop_pre_header
      _
    $region3: #{tpu_custom_call.1} parent=1 // loop_header
      %s21 = sphi 0, %s25
      %p22 = scmp.ge.s32.totalorder %s21, 4
      %s31 = sphi 0, %s33
      %s34 = sphi 0, %s31
      %s35 = sphi 0, %s34
      %s51 = sphi 0, %s35
      %s55 = sphi 0, %s55
      %s57 = sphi 0, %s55
      %s58 = sphi 0, %s57
      %s72 = sphi 0, %s58
      %s76 = sphi 0, %s76
      %s78 = sphi 0, %s76
      %s79 = sphi 0, %s78
      %s93 = sphi 0, %s79
      %s97 = sphi 0, %s97
      %s99 = sphi 0, %s97
      %s100 = sphi 0, %s99
      %s114 = sphi 0, %s100
      %s118 = sphi 0, %s118
      %s120 = sphi 0, %s118
      %s121 = sphi 0, %s120
      %s135 = sphi 0, %s121
      %s139 = sphi 0, %s139
      %s141 = sphi 0, %s139
      %s142 = sphi 0, %s141
      %s156 = sphi 0, %s142
      %s160 = sphi 0, %s160
      %s162 = sphi 0, %s160
      %s163 = sphi 0, %s162
      %s177 = sphi 0, %s163
      %s183 = sphi 0, %s185
      %s186 = sphi 0, %s183
      %s187 = sphi 0, %s186
      %s203 = sphi 0, %s187
    $region4: #{tpu_custom_call.1} parent=1 // loop_header_branch
      %24 = sbr.rel (%p22) target = $region8
    $region5: #{tpu_custom_call.1} parent=1 // loop_body
      %s26 = ssub.s32 %s21, 1
      %s27 = ssub.s32 %s21, 2
      %s28 = sadd.s32 %s21, 1
      %s29 = ssub.s32 %s21, %s28
      %p30 = scmp.eq.s32.totalorder %s29, 0
      %s32 = sadd.s32 %s31, 1
      %s33 = scalar_select %p30, %s31, %s32
      %p36 = pneg %p30
      %p37 = scmp.eq.s32.totalorder %s21, 1
      %p38 = por %p36, %p37
      %p39 = scmp.ne.s32.totalorder %s31, %s34
      %p40 = scmp.eq.s32.totalorder %s21, 0
      %p41 = por %p39, %p40
      %p42 = scmp.ne.s32.totalorder %s31, %s34
      %p43 = scmp.eq.s32.totalorder %s26, 1
      %p44 = por %p42, %p43
      %p45 = scmp.ne.s32.totalorder %s34, %s35
      %p46 = scmp.eq.s32.totalorder %s26, 0
      %p47 = por %p45, %p46
      %p48 = scmp.ne.s32.totalorder %s34, %s35
      %p49 = scmp.eq.s32.totalorder %s27, 1
      %p50 = por %p48, %p49
      %p52 = scmp.ne.s32.totalorder %s35, %s51
      %p53 = scmp.eq.s32.totalorder %s27, 0
      %p54 = por %p52, %p53
      %s56 = sadd.s32 %s55, 1
      %p59 = scmp.eq.s32.totalorder %s21, 1
      %p60 = scmp.ne.s32.totalorder %s55, %s57
      %p61 = scmp.eq.s32.totalorder %s21, 0
      %p62 = por %p60, %p61
      %p63 = scmp.ne.s32.totalorder %s55, %s57
      %p64 = scmp.eq.s32.totalorder %s26, 1
      %p65 = por %p63, %p64
      %p66 = scmp.ne.s32.totalorder %s57, %s58
      %p67 = scmp.eq.s32.totalorder %s26, 0
      %p68 = por %p66, %p67
      %p69 = scmp.ne.s32.totalorder %s57, %s58
      %p70 = scmp.eq.s32.totalorder %s27, 1
      %p71 = por %p69, %p70
      %p73 = scmp.ne.s32.totalorder %s58, %s72
      %p74 = scmp.eq.s32.totalorder %s27, 0
      %p75 = por %p73, %p74
      %s77 = sadd.s32 %s76, 1
      %p80 = scmp.eq.s32.totalorder %s21, 1
      %p81 = scmp.ne.s32.totalorder %s76, %s78
      %p82 = scmp.eq.s32.totalorder %s21, 0
      %p83 = por %p81, %p82
      %p84 = scmp.ne.s32.totalorder %s76, %s78
      %p85 = scmp.eq.s32.totalorder %s26, 1
      %p86 = por %p84, %p85
      %p87 = scmp.ne.s32.totalorder %s78, %s79
      %p88 = scmp.eq.s32.totalorder %s26, 0
      %p89 = por %p87, %p88
      %p90 = scmp.ne.s32.totalorder %s78, %s79
      %p91 = scmp.eq.s32.totalorder %s27, 1
      %p92 = por %p90, %p91
      %p94 = scmp.ne.s32.totalorder %s79, %s93
      %p95 = scmp.eq.s32.totalorder %s27, 0
      %p96 = por %p94, %p95
      %s98 = sadd.s32 %s97, 1
      %p101 = scmp.eq.s32.totalorder %s21, 1
      %p102 = scmp.ne.s32.totalorder %s97, %s99
      %p103 = scmp.eq.s32.totalorder %s21, 0
      %p104 = por %p102, %p103
      %p105 = scmp.ne.s32.totalorder %s97, %s99
      %p106 = scmp.eq.s32.totalorder %s26, 1
      %p107 = por %p105, %p106
      %p108 = scmp.ne.s32.totalorder %s99, %s100
      %p109 = scmp.eq.s32.totalorder %s26, 0
      %p110 = por %p108, %p109
      %p111 = scmp.ne.s32.totalorder %s99, %s100
      %p112 = scmp.eq.s32.totalorder %s27, 1
      %p113 = por %p111, %p112
      %p115 = scmp.ne.s32.totalorder %s100, %s114
      %p116 = scmp.eq.s32.totalorder %s27, 0
      %p117 = por %p115, %p116
      %s119 = sadd.s32 %s118, 1
      %p122 = scmp.eq.s32.totalorder %s21, 1
      %p123 = scmp.ne.s32.totalorder %s118, %s120
      %p124 = scmp.eq.s32.totalorder %s21, 0
      %p125 = por %p123, %p124
      %p126 = scmp.ne.s32.totalorder %s118, %s120
      %p127 = scmp.eq.s32.totalorder %s26, 1
      %p128 = por %p126, %p127
      %p129 = scmp.ne.s32.totalorder %s120, %s121
      %p130 = scmp.eq.s32.totalorder %s26, 0
      %p131 = por %p129, %p130
      %p132 = scmp.ne.s32.totalorder %s120, %s121
      %p133 = scmp.eq.s32.totalorder %s27, 1
      %p134 = por %p132, %p133
      %p136 = scmp.ne.s32.totalorder %s121, %s135
      %p137 = scmp.eq.s32.totalorder %s27, 0
      %p138 = por %p136, %p137
      %s140 = sadd.s32 %s139, 1
      %p143 = scmp.eq.s32.totalorder %s21, 1
      %p144 = scmp.ne.s32.totalorder %s139, %s141
      %p145 = scmp.eq.s32.totalorder %s21, 0
      %p146 = por %p144, %p145
      %p147 = scmp.ne.s32.totalorder %s139, %s141
      %p148 = scmp.eq.s32.totalorder %s26, 1
      %p149 = por %p147, %p148
      %p150 = scmp.ne.s32.totalorder %s141, %s142
      %p151 = scmp.eq.s32.totalorder %s26, 0
      %p152 = por %p150, %p151
      %p153 = scmp.ne.s32.totalorder %s141, %s142
      %p154 = scmp.eq.s32.totalorder %s27, 1
      %p155 = por %p153, %p154
      %p157 = scmp.ne.s32.totalorder %s142, %s156
      %p158 = scmp.eq.s32.totalorder %s27, 0
      %p159 = por %p157, %p158
      %s161 = sadd.s32 %s160, 1
      %p164 = scmp.eq.s32.totalorder %s21, 1
      %p165 = scmp.ne.s32.totalorder %s160, %s162
      %p166 = scmp.eq.s32.totalorder %s21, 0
      %p167 = por %p165, %p166
      %p168 = scmp.ne.s32.totalorder %s160, %s162
      %p169 = scmp.eq.s32.totalorder %s26, 1
      %p170 = por %p168, %p169
      %p171 = scmp.ne.s32.totalorder %s162, %s163
      %p172 = scmp.eq.s32.totalorder %s26, 0
      %p173 = por %p171, %p172
      %p174 = scmp.ne.s32.totalorder %s162, %s163
      %p175 = scmp.eq.s32.totalorder %s27, 1
      %p176 = por %p174, %p175
      %p178 = scmp.ne.s32.totalorder %s163, %s177
      %p179 = scmp.eq.s32.totalorder %s27, 0
      %p180 = por %p178, %p179
      %s181 = ssub.s32 %s21, %s28
      %p182 = scmp.eq.s32.totalorder %s181, 0
      %s184 = sadd.s32 %s183, 1
      %s185 = scalar_select %p182, %s183, %s184
      %p188 = pneg %p182
      %p189 = scmp.eq.s32.totalorder %s21, 1
      %p190 = por %p188, %p189
      %p191 = scmp.ne.s32.totalorder %s183, %s186
      %p192 = scmp.eq.s32.totalorder %s21, 0
      %p193 = por %p191, %p192
      %p194 = scmp.ne.s32.totalorder %s183, %s186
      %p195 = scmp.eq.s32.totalorder %s26, 1
      %p196 = por %p194, %p195
      %p197 = scmp.ne.s32.totalorder %s186, %s187
      %p198 = scmp.eq.s32.totalorder %s26, 0
      %p199 = por %p197, %p198
      %p200 = scmp.ne.s32.totalorder %s186, %s187
      %p201 = scmp.eq.s32.totalorder %s27, 1
      %p202 = por %p200, %p201
      %p204 = scmp.ne.s32.totalorder %s187, %s203
      %p205 = scmp.eq.s32.totalorder %s27, 0
      %p206 = por %p204, %p205
      %p207 = scmp.le.s32.totalorder 1, %s21
      %p208 = scmp.lt.s32.totalorder %s21, 3
      %p209 = pnand %p207, %p208
      %p210 = pneg %p209
      // Predicated region
      $region9: #{tpu_custom_call.1} parent=5 // pred_check
        _
      $region10: #{tpu_custom_call.1} parent=5 // pred_check_branch
        %212 = sbr.rel (%p209) target = $region12
      $region11: #{tpu_custom_call.1} parent=5 // pred_region
        %s213 = ssub.s32 %s21, 1
        // Predicated region
        $region13: #{tpu_custom_call.1} parent=11 // pred_check
          %p214 = pneg %p68
        $region14: #{tpu_custom_call.1} parent=11 // pred_check_branch
          %216 = sbr.rel (%p214) target = $region16
        $region15: #{tpu_custom_call.1} parent=11 // pred_region
          %s218 = ssub.s32 6272, 6272
          %219 = vsyncadd [#allocation6], %s218
          %s220 = sshll.u32 [#allocation5], 4
          %s221 = int_to_ptr.vmem [resolvable:$true] %s220
          %226 = dma.hbm_to_vmem [thread:$0]  %s1, 6272, %s221, [#allocation6], 64, 64, 4
        $region16: #{tpu_custom_call.1} parent=11 // pred_fallthru
          _
        // Predicated region
        $region17: #{tpu_custom_call.1} parent=11 // pred_check
          %p227 = pneg %p89
        $region18: #{tpu_custom_call.1} parent=11 // pred_check_branch
          %229 = sbr.rel (%p227) target = $region20
        $region19: #{tpu_custom_call.1} parent=11 // pred_region
          _
        $region20: #{tpu_custom_call.1} parent=11 // pred_fallthru
          _
        // Predicated region
        $region21: #{tpu_custom_call.1} parent=11 // pred_check
          %p230 = pneg %p110
        $region22: #{tpu_custom_call.1} parent=11 // pred_check_branch
          %232 = sbr.rel (%p230) target = $region24
        $region23: #{tpu_custom_call.1} parent=11 // pred_region
          %s234 = ssub.s32 1024, 1024
          %235 = vsyncadd [#allocation6], %s234
          %s236 = sshll.u32 [#allocation7], 4
          %s237 = int_to_ptr.vmem [resolvable:$true] %s236
          %242 = dma.hbm_to_vmem [thread:$0]  %s3, 1024, %s237, [#allocation6], 64, 64, 4
        $region24: #{tpu_custom_call.1} parent=11 // pred_fallthru
          _
        // Predicated region
        $region25: #{tpu_custom_call.1} parent=11 // pred_check
          %p243 = pneg %p131
        $region26: #{tpu_custom_call.1} parent=11 // pred_check_branch
          %245 = sbr.rel (%p243) target = $region28
        $region27: #{tpu_custom_call.1} parent=11 // pred_region
          _
        $region28: #{tpu_custom_call.1} parent=11 // pred_fallthru
          _
        // Predicated region
        $region29: #{tpu_custom_call.1} parent=11 // pred_check
          %p246 = pneg %p152
        $region30: #{tpu_custom_call.1} parent=11 // pred_check_branch
          %248 = sbr.rel (%p246) target = $region32
        $region31: #{tpu_custom_call.1} parent=11 // pred_region
          %s250 = ssub.s32 1024, 1024
          %251 = vsyncadd [#allocation9], %s250
          %s252 = sshll.u32 [#allocation8], 4
          %s253 = int_to_ptr.vmem [resolvable:$true] %s252
          %258 = dma.hbm_to_vmem [thread:$0]  %s5, 1024, %s253, [#allocation9], 64, 64, 4
        $region32: #{tpu_custom_call.1} parent=11 // pred_fallthru
          _
        // Predicated region
        $region33: #{tpu_custom_call.1} parent=11 // pred_check
          %p259 = pneg %p173
        $region34: #{tpu_custom_call.1} parent=11 // pred_check_branch
          %261 = sbr.rel (%p259) target = $region36
        $region35: #{tpu_custom_call.1} parent=11 // pred_region
          _
        $region36: #{tpu_custom_call.1} parent=11 // pred_fallthru
          _
      $region12: #{tpu_custom_call.1} parent=5 // pred_fallthru
        _
      %p262 = scmp.lt.s32.totalorder %s21, 2
      // Predicated region
      $region37: #{tpu_custom_call.1} parent=5 // pred_check
        %p263 = pneg %p262
      $region38: #{tpu_custom_call.1} parent=5 // pred_check_branch
        %265 = sbr.rel (%p263) target = $region40
      $region39: #{tpu_custom_call.1} parent=5 // pred_region
        // Predicated region
        $region41: #{tpu_custom_call.1} parent=39 // pred_check
          %p266 = pneg %p41
        $region42: #{tpu_custom_call.1} parent=39 // pred_check_branch
          %268 = sbr.rel (%p266) target = $region44
        $region43: #{tpu_custom_call.1} parent=39 // pred_region
          %s269 = sand.u32 %s31, 1
          %s270 = scalar_lea.sflag [#allocation3], %s269
          %s271 = sand.u32 %s31, 1
          %s272 = smul.addr %s271, 112
          %s273 = scalar_lea.vmem [#allocation2], %s272
          %s274 = smul.u32 2, %s21
          %s276 = ssub.s32 1792, 1792
          %277 = vsyncadd %s270, %s276
          %s278 = smul.addr %s274, 7
          %s279 = smul.addr %s278, 128
          %s280 = scalar_lea.hbm %s0, %s279
          %s281 = sshll.u32 %s273, 4
          %s282 = int_to_ptr.vmem [resolvable:$true] %s281
          %287 = dma.hbm_to_vmem [thread:$0]  %s280, 1792, %s282, %s270, 896, 896, 56
        $region44: #{tpu_custom_call.1} parent=39 // pred_fallthru
          _
      $region40: #{tpu_custom_call.1} parent=5 // pred_fallthru
        _
      %p288 = scmp.le.s32.totalorder 1, %s21
      %p289 = scmp.lt.s32.totalorder %s21, 3
      %p290 = pnand %p288, %p289
      %p291 = pneg %p290
      // Predicated region
      $region45: #{tpu_custom_call.1} parent=5 // pred_check
        _
      $region46: #{tpu_custom_call.1} parent=5 // pred_check_branch
        %293 = sbr.rel (%p290) target = $region48
      $region47: #{tpu_custom_call.1} parent=5 // pred_region
        %s294 = ssub.s32 %s21, 1
        %s295 = sand.u32 %s34, 1
        %s296 = scalar_lea.sflag [#allocation3], %s295
        %s297 = sand.u32 %s34, 1
        %s298 = smul.addr %s297, 112
        %s299 = scalar_lea.vmem [#allocation2], %s298
        // Predicated region
        $region49: #{tpu_custom_call.1} parent=47 // pred_check
          %p300 = pneg %p47
        $region50: #{tpu_custom_call.1} parent=47 // pred_check_branch
          %302 = sbr.rel (%p300) target = $region52
        $region51: #{tpu_custom_call.1} parent=47 // pred_region
          %303 = dma.done %s296, 1792
        $region52: #{tpu_custom_call.1} parent=47 // pred_fallthru
          _
        // Predicated region
        $region53: #{tpu_custom_call.1} parent=47 // pred_check
          %p304 = pneg %p68
        $region54: #{tpu_custom_call.1} parent=47 // pred_check_branch
          %306 = sbr.rel (%p304) target = $region56
        $region55: #{tpu_custom_call.1} parent=47 // pred_region
          %307 = dma.done [#allocation6], 6272
        $region56: #{tpu_custom_call.1} parent=47 // pred_fallthru
          _
        // Predicated region
        $region57: #{tpu_custom_call.1} parent=47 // pred_check
          %p308 = pneg %p110
        $region58: #{tpu_custom_call.1} parent=47 // pred_check_branch
          %310 = sbr.rel (%p308) target = $region60
        $region59: #{tpu_custom_call.1} parent=47 // pred_region
          %311 = dma.done [#allocation6], 1024
        $region60: #{tpu_custom_call.1} parent=47 // pred_fallthru
          _
        // Predicated region
        $region61: #{tpu_custom_call.1} parent=47 // pred_check
          %p312 = pneg %p152
        $region62: #{tpu_custom_call.1} parent=47 // pred_check_branch
          %314 = sbr.rel (%p312) target = $region64
        $region63: #{tpu_custom_call.1} parent=47 // pred_region
          %315 = dma.done [#allocation9], 1024
        $region64: #{tpu_custom_call.1} parent=47 // pred_fallthru
          _
        %s316 = sand.u32 %s34, 1
        %s317 = scalar_lea.sflag [#allocation3], %s316
        %s318 = sand.u32 %s34, 1
        %s319 = smul.addr %s318, 112
        %s320 = scalar_lea.vmem [#allocation2], %s319
        %p321 = pneg %p47
        %p322 = pneg %p44
        %p323 = pneg %p68
        %p324 = pneg %p65
        %p325 = pneg %p89
        %p326 = pneg %p86
        %p327 = pneg %p110
        %p328 = pneg %p107
        %p329 = pneg %p131
        %p330 = pneg %p128
        %p331 = pneg %p152
        %p332 = pneg %p149
        %p333 = pneg %p173
        %p334 = pneg %p170
        %p335 = pneg %p199
        %p336 = pneg %p196
        %s337 = sand.u32 %s186, 1
        %s338 = scalar_lea.sflag [#allocation4], %s337
        %s339 = sand.u32 %s186, 1
        %s340 = smul.addr %s339, 8
        %s341 = scalar_lea.vmem [#allocation10], %s340
        %s342 = smul.u32 2, %s26
        %s343 = smul.u32 2, %s26
        %v345 = vld [vmem:[%s299] sm:$0xff]
        %v346 = vld [vmem:[%s299 + $0x8] sm:$0xff]
        %v347 = vld [vmem:[%s299 + $0x10] sm:$0xff]
        %v348 = vld [vmem:[%s299 + $0x18] sm:$0xff]
        %v349 = vld [vmem:[%s299 + $0x20] sm:$0xff]
        %v350 = vld [vmem:[%s299 + $0x28] sm:$0xff]
        %v351 = vld [vmem:[%s299 + $0x30] sm:$0xff]
        %v352 = vld [vmem:[%s299 + $0x38] sm:$0xff]
        %v353 = vld [vmem:[%s299 + $0x40] sm:$0xff]
        %v354 = vld [vmem:[%s299 + $0x48] sm:$0xff]
        %v355 = vld [vmem:[%s299 + $0x50] sm:$0xff]
        %v356 = vld [vmem:[%s299 + $0x58] sm:$0xff]
        %v357 = vld [vmem:[%s299 + $0x60] sm:$0xff]
        %v358 = vld [vmem:[%s299 + $0x68] sm:$0xff]
        %v359 = vpack.c.bf16 %v352, %v345
        %v360 = vpack.c.bf16 %v353, %v346
        %v361 = vpack.c.bf16 %v354, %v347
        %v362 = vpack.c.bf16 %v355, %v348
        %v363 = vpack.c.bf16 %v356, %v349
        %v364 = vpack.c.bf16 %v357, %v350
        %v365 = vpack.c.bf16 %v358, %v351
        %v366 = vld [vmem:[#allocation5] sm:$0xf]
        %v367 = vld [vmem:[#allocation5 + $0x4] sm:$0xf]
        %v368 = vld [vmem:[#allocation5 + $0x8] sm:$0xf]
        %v369 = vld [vmem:[#allocation5 + $0xc] sm:$0xf]
        %v370 = vld [vmem:[#allocation5 + $0x10] sm:$0xf]
        %v371 = vld [vmem:[#allocation5 + $0x14] sm:$0xf]
        %v372 = vld [vmem:[#allocation5 + $0x18] sm:$0xf]
        %v373 = vld [vmem:[#allocation5 + $0x1c] sm:$0xf]
        %v374 = vld [vmem:[#allocation5 + $0x20] sm:$0xf]
        %v375 = vld [vmem:[#allocation5 + $0x24] sm:$0xf]
        %v376 = vld [vmem:[#allocation5 + $0x28] sm:$0xf]
        %v377 = vld [vmem:[#allocation5 + $0x2c] sm:$0xf]
        %v378 = vld [vmem:[#allocation5 + $0x30] sm:$0xf]
        %v379 = vld [vmem:[#allocation5 + $0x34] sm:$0xf]
        %v380 = vld [vmem:[#allocation5 + $0x38] sm:$0xf]
        %v381 = vld [vmem:[#allocation5 + $0x3c] sm:$0xf]
        %v382 = vld [vmem:[#allocation5 + $0x40] sm:$0xf]
        %v383 = vld [vmem:[#allocation5 + $0x44] sm:$0xf]
        %v384 = vld [vmem:[#allocation5 + $0x48] sm:$0xf]
        %v385 = vld [vmem:[#allocation5 + $0x4c] sm:$0xf]
        %v386 = vld [vmem:[#allocation5 + $0x50] sm:$0xf]
        %v387 = vld [vmem:[#allocation5 + $0x54] sm:$0xf]
        %v388 = vld [vmem:[#allocation5 + $0x58] sm:$0xf]
        %v389 = vld [vmem:[#allocation5 + $0x5c] sm:$0xf]
        %v390 = vld [vmem:[#allocation5 + $0x60] sm:$0xf]
        %v391 = vld [vmem:[#allocation5 + $0x64] sm:$0xf]
        %v392 = vld [vmem:[#allocation5 + $0x68] sm:$0xf]
        %v393 = vld [vmem:[#allocation5 + $0x6c] sm:$0xf]
        %v394 = vld [vmem:[#allocation5 + $0x70] sm:$0xf]
        %v395 = vld [vmem:[#allocation5 + $0x74] sm:$0xf]
        %v396 = vld [vmem:[#allocation5 + $0x78] sm:$0xf]
        %v397 = vld [vmem:[#allocation5 + $0x7c] sm:$0xf]
        %v398 = vld [vmem:[#allocation5 + $0x80] sm:$0xf]
        %v399 = vld [vmem:[#allocation5 + $0x84] sm:$0xf]
        %v400 = vld [vmem:[#allocation5 + $0x88] sm:$0xf]
        %v401 = vld [vmem:[#allocation5 + $0x8c] sm:$0xf]
        %v402 = vld [vmem:[#allocation5 + $0x90] sm:$0xf]
        %v403 = vld [vmem:[#allocation5 + $0x94] sm:$0xf]
        %v404 = vld [vmem:[#allocation5 + $0x98] sm:$0xf]
        %v405 = vld [vmem:[#allocation5 + $0x9c] sm:$0xf]
        %v406 = vld [vmem:[#allocation5 + $0xa0] sm:$0xf]
        %v407 = vld [vmem:[#allocation5 + $0xa4] sm:$0xf]
        %v408 = vld [vmem:[#allocation5 + $0xa8] sm:$0xf]
        %v409 = vld [vmem:[#allocation5 + $0xac] sm:$0xf]
        %v410 = vld [vmem:[#allocation5 + $0xb0] sm:$0xf]
        %v411 = vld [vmem:[#allocation5 + $0xb4] sm:$0xf]
        %v412 = vld [vmem:[#allocation5 + $0xb8] sm:$0xf]
        %v413 = vld [vmem:[#allocation5 + $0xbc] sm:$0xf]
        %v414 = vld [vmem:[#allocation5 + $0xc0] sm:$0xf]
        %v415 = vld [vmem:[#allocation5 + $0xc4] sm:$0xf]
        %v416 = vld [vmem:[#allocation5 + $0xc8] sm:$0xf]
        %v417 = vld [vmem:[#allocation5 + $0xcc] sm:$0xf]
        %v418 = vld [vmem:[#allocation5 + $0xd0] sm:$0xf]
        %v419 = vld [vmem:[#allocation5 + $0xd4] sm:$0xf]
        %v420 = vld [vmem:[#allocation5 + $0xd8] sm:$0xf]
        %v421 = vld [vmem:[#allocation5 + $0xdc] sm:$0xf]
        %v422 = vld [vmem:[#allocation5 + $0xe0] sm:$0xf]
        %v423 = vld [vmem:[#allocation5 + $0xe4] sm:$0xf]
        %v424 = vld [vmem:[#allocation5 + $0xe8] sm:$0xf]
        %v425 = vld [vmem:[#allocation5 + $0xec] sm:$0xf]
        %v426 = vld [vmem:[#allocation5 + $0xf0] sm:$0xf]
        %v427 = vld [vmem:[#allocation5 + $0xf4] sm:$0xf]
        %v428 = vld [vmem:[#allocation5 + $0xf8] sm:$0xf]
        %v429 = vld [vmem:[#allocation5 + $0xfc] sm:$0xf]
        %v430 = vld [vmem:[#allocation5 + $0x100] sm:$0xf]
        %v431 = vld [vmem:[#allocation5 + $0x104] sm:$0xf]
        %v432 = vld [vmem:[#allocation5 + $0x108] sm:$0xf]
        %v433 = vld [vmem:[#allocation5 + $0x10c] sm:$0xf]
        %v434 = vld [vmem:[#allocation5 + $0x110] sm:$0xf]
        %v435 = vld [vmem:[#allocation5 + $0x114] sm:$0xf]
        %v436 = vld [vmem:[#allocation5 + $0x118] sm:$0xf]
        %v437 = vld [vmem:[#allocation5 + $0x11c] sm:$0xf]
        %v438 = vld [vmem:[#allocation5 + $0x120] sm:$0xf]
        %v439 = vld [vmem:[#allocation5 + $0x124] sm:$0xf]
        %v440 = vld [vmem:[#allocation5 + $0x128] sm:$0xf]
        %v441 = vld [vmem:[#allocation5 + $0x12c] sm:$0xf]
        %v442 = vld [vmem:[#allocation5 + $0x130] sm:$0xf]
        %v443 = vld [vmem:[#allocation5 + $0x134] sm:$0xf]
        %v444 = vld [vmem:[#allocation5 + $0x138] sm:$0xf]
        %v445 = vld [vmem:[#allocation5 + $0x13c] sm:$0xf]
        %v446 = vld [vmem:[#allocation5 + $0x140] sm:$0xf]
        %v447 = vld [vmem:[#allocation5 + $0x144] sm:$0xf]
        %v448 = vld [vmem:[#allocation5 + $0x148] sm:$0xf]
        %v449 = vld [vmem:[#allocation5 + $0x14c] sm:$0xf]
        %v450 = vld [vmem:[#allocation5 + $0x150] sm:$0xf]
        %v451 = vld [vmem:[#allocation5 + $0x154] sm:$0xf]
        %v452 = vld [vmem:[#allocation5 + $0x158] sm:$0xf]
        %v453 = vld [vmem:[#allocation5 + $0x15c] sm:$0xf]
        %v454 = vld [vmem:[#allocation5 + $0x160] sm:$0xf]
        %v455 = vld [vmem:[#allocation5 + $0x164] sm:$0xf]
        %v456 = vld [vmem:[#allocation5 + $0x168] sm:$0xf]
        %v457 = vld [vmem:[#allocation5 + $0x16c] sm:$0xf]
        %v458 = vld [vmem:[#allocation5 + $0x170] sm:$0xf]
        %v459 = vld [vmem:[#allocation5 + $0x174] sm:$0xf]
        %v460 = vld [vmem:[#allocation5 + $0x178] sm:$0xf]
        %v461 = vld [vmem:[#allocation5 + $0x17c] sm:$0xf]
        %v462 = vld [vmem:[#allocation5 + $0x180] sm:$0xf]
        %v463 = vld [vmem:[#allocation5 + $0x184] sm:$0xf]
        %v464 = vld [vmem:[%s2] sm:$0x1]
        %v466 = vlaneseq
        %v467 = vshrl.u32 %v466, 7
        %v468 = vsub.s32 0, %v467
        %v469 = vrot.slane %v464, %v468
        %v569 = vunpack.c.l.b16 %v366
        %v570 = vunpack.c.l.b16 %v367
        %v571 = vunpack.c.l.b16 %v368
        %v572 = vunpack.c.l.b16 %v369
        %v573 = vunpack.c.l.b16 %v370
        %v574 = vunpack.c.l.b16 %v371
        %v575 = vunpack.c.l.b16 %v372
        %v576 = vunpack.c.l.b16 %v373
        %v577 = vunpack.c.l.b16 %v374
        %v578 = vunpack.c.l.b16 %v375
        %v579 = vunpack.c.l.b16 %v376
        %v580 = vunpack.c.l.b16 %v377
        %v581 = vunpack.c.l.b16 %v378
        %v582 = vunpack.c.l.b16 %v379
        %v583 = vunpack.c.l.b16 %v380
        %v584 = vunpack.c.l.b16 %v381
        %v585 = vunpack.c.l.b16 %v382
        %v586 = vunpack.c.l.b16 %v383
        %v587 = vunpack.c.l.b16 %v384
        %v588 = vunpack.c.l.b16 %v385
        %v589 = vunpack.c.l.b16 %v386
        %v590 = vunpack.c.l.b16 %v387
        %v591 = vunpack.c.l.b16 %v388
        %v592 = vunpack.c.l.b16 %v389
        %v593 = vunpack.c.l.b16 %v390
        %v594 = vunpack.c.l.b16 %v391
        %v595 = vunpack.c.l.b16 %v392
        %v596 = vunpack.c.l.b16 %v393
        %v597 = vunpack.c.l.b16 %v394
        %v598 = vunpack.c.l.b16 %v395
        %v599 = vunpack.c.l.b16 %v396
        %v600 = vunpack.c.l.b16 %v397
        %v601 = vunpack.c.l.b16 %v398
        %v602 = vunpack.c.l.b16 %v399
        %v603 = vunpack.c.l.b16 %v400
        %v604 = vunpack.c.l.b16 %v401
        %v605 = vunpack.c.l.b16 %v402
        %v606 = vunpack.c.l.b16 %v403
        %v607 = vunpack.c.l.b16 %v404
        %v608 = vunpack.c.l.b16 %v405
        %v609 = vunpack.c.l.b16 %v406
        %v610 = vunpack.c.l.b16 %v407
        %v611 = vunpack.c.l.b16 %v408
        %v612 = vunpack.c.l.b16 %v409
        %v613 = vunpack.c.l.b16 %v410
        %v614 = vunpack.c.l.b16 %v411
        %v615 = vunpack.c.l.b16 %v412
        %v616 = vunpack.c.l.b16 %v413
        %v617 = vunpack.c.l.b16 %v414
        %v618 = vunpack.c.l.b16 %v415
        %v619 = vunpack.c.l.b16 %v416
        %v620 = vunpack.c.l.b16 %v417
        %v621 = vunpack.c.l.b16 %v418
        %v622 = vunpack.c.l.b16 %v419
        %v623 = vunpack.c.l.b16 %v420
        %v624 = vunpack.c.l.b16 %v421
        %v625 = vunpack.c.l.b16 %v422
        %v626 = vunpack.c.l.b16 %v423
        %v627 = vunpack.c.l.b16 %v424
        %v628 = vunpack.c.l.b16 %v425
        %v629 = vunpack.c.l.b16 %v426
        %v630 = vunpack.c.l.b16 %v427
        %v631 = vunpack.c.l.b16 %v428
        %v632 = vunpack.c.l.b16 %v429
        %v633 = vunpack.c.l.b16 %v430
        %v634 = vunpack.c.l.b16 %v431
        %v635 = vunpack.c.l.b16 %v432
        %v636 = vunpack.c.l.b16 %v433
        %v637 = vunpack.c.l.b16 %v434
        %v638 = vunpack.c.l.b16 %v435
        %v639 = vunpack.c.l.b16 %v436
        %v640 = vunpack.c.l.b16 %v437
        %v641 = vunpack.c.l.b16 %v438
        %v642 = vunpack.c.l.b16 %v439
        %v643 = vunpack.c.l.b16 %v440
        %v644 = vunpack.c.l.b16 %v441
        %v645 = vunpack.c.l.b16 %v442
        %v646 = vunpack.c.l.b16 %v443
        %v647 = vunpack.c.l.b16 %v444
        %v648 = vunpack.c.l.b16 %v445
        %v649 = vunpack.c.l.b16 %v446
        %v650 = vunpack.c.l.b16 %v447
        %v651 = vunpack.c.l.b16 %v448
        %v652 = vunpack.c.l.b16 %v449
        %v653 = vunpack.c.l.b16 %v450
        %v654 = vunpack.c.l.b16 %v451
        %v655 = vunpack.c.l.b16 %v452
        %v656 = vunpack.c.l.b16 %v453
        %v657 = vunpack.c.l.b16 %v454
        %v658 = vunpack.c.l.b16 %v455
        %v659 = vunpack.c.l.b16 %v456
        %v660 = vunpack.c.l.b16 %v457
        %v661 = vunpack.c.l.b16 %v458
        %v662 = vunpack.c.l.b16 %v459
        %v663 = vunpack.c.l.b16 %v460
        %v664 = vunpack.c.l.b16 %v461
        %v665 = vunpack.c.l.b16 %v462
        %v666 = vunpack.c.l.b16 %v463
        %v667 = vpack.c.b16 %v570, %v569
        %v668 = vpack.c.b16 %v572, %v571
        %v669 = vpack.c.b16 %v574, %v573
        %v670 = vpack.c.b16 %v576, %v575
        %v671 = vpack.c.b16 %v578, %v577
        %v672 = vpack.c.b16 %v580, %v579
        %v673 = vpack.c.b16 %v582, %v581
        %v674 = vpack.c.b16 %v584, %v583
        %v675 = vpack.c.b16 %v586, %v585
        %v676 = vpack.c.b16 %v588, %v587
        %v677 = vpack.c.b16 %v590, %v589
        %v678 = vpack.c.b16 %v592, %v591
        %v679 = vpack.c.b16 %v594, %v593
        %v680 = vpack.c.b16 %v596, %v595
        %v681 = vpack.c.b16 %v598, %v597
        %v682 = vpack.c.b16 %v600, %v599
        %v683 = vpack.c.b16 %v602, %v601
        %v684 = vpack.c.b16 %v604, %v603
        %v685 = vpack.c.b16 %v606, %v605
        %v686 = vpack.c.b16 %v608, %v607
        %v687 = vpack.c.b16 %v610, %v609
        %v688 = vpack.c.b16 %v612, %v611
        %v689 = vpack.c.b16 %v614, %v613
        %v690 = vpack.c.b16 %v616, %v615
        %v691 = vpack.c.b16 %v618, %v617
        %v692 = vpack.c.b16 %v620, %v619
        %v693 = vpack.c.b16 %v622, %v621
        %v694 = vpack.c.b16 %v624, %v623
        %v695 = vpack.c.b16 %v626, %v625
        %v696 = vpack.c.b16 %v628, %v627
        %v697 = vpack.c.b16 %v630, %v629
        %v698 = vpack.c.b16 %v632, %v631
        %v699 = vpack.c.b16 %v634, %v633
        %v700 = vpack.c.b16 %v636, %v635
        %v701 = vpack.c.b16 %v638, %v637
        %v702 = vpack.c.b16 %v640, %v639
        %v703 = vpack.c.b16 %v642, %v641
        %v704 = vpack.c.b16 %v644, %v643
        %v705 = vpack.c.b16 %v646, %v645
        %v706 = vpack.c.b16 %v648, %v647
        %v707 = vpack.c.b16 %v650, %v649
        %v708 = vpack.c.b16 %v652, %v651
        %v709 = vpack.c.b16 %v654, %v653
        %v710 = vpack.c.b16 %v656, %v655
        %v711 = vpack.c.b16 %v658, %v657
        %v712 = vpack.c.b16 %v660, %v659
        %v713 = vpack.c.b16 %v662, %v661
        %v714 = vpack.c.b16 %v664, %v663
        %v715 = vpack.c.b16 %v666, %v665
        %vm765 = vcmask 130048
        %v767 = vsel %vm765, %v365, 0
        %769 = vmatprep.subr.bf16.mxu0 0
        %770 = vmatpush1.bf16.msra.mxu0 %v674
        %771 = vmatprep.subr.bf16.mxu0 0
        %772 = vmatpush1.bf16.msra.mxu0 %v673
        %773 = vmatprep.subr.bf16.mxu0 0
        %774 = vmatpush1.bf16.msra.mxu0 %v672
        %775 = vmatprep.subr.bf16.mxu0 0
        %776 = vmatpush1.bf16.msra.mxu0 %v671
        %777 = vmatprep.subr.bf16.mxu0 0
        %778 = vmatpush1.bf16.msra.mxu0 %v670
        %779 = vmatprep.subr.bf16.mxu0 0
        %780 = vmatpush1.bf16.msra.mxu0 %v669
        %781 = vmatprep.subr.bf16.mxu0 0
        %782 = vmatpush1.bf16.msra.mxu0 %v668
        %783 = vmatprep.subr.bf16.mxu0 0
        %784 = vmatpush1.bf16.msra.mxu0 %v667
        %785 = vmatprep.subr.bf16.mxu0 0
        %786 = vmatpush2.bf16.msra.mxu0 %v682
        %787 = vmatprep.subr.bf16.mxu0 0
        %788 = vmatpush2.bf16.msra.mxu0 %v681
        %789 = vmatprep.subr.bf16.mxu0 0
        %790 = vmatpush2.bf16.msra.mxu0 %v680
        %791 = vmatprep.subr.bf16.mxu0 0
        %792 = vmatpush2.bf16.msra.mxu0 %v679
        %793 = vmatprep.subr.bf16.mxu0 0
        %794 = vmatpush2.bf16.msra.mxu0 %v678
        %795 = vmatprep.subr.bf16.mxu0 0
        %796 = vmatpush2.bf16.msra.mxu0 %v677
        %797 = vmatprep.subr.bf16.mxu0 0
        %798 = vmatpush2.bf16.msra.mxu0 %v676
        %799 = vmatprep.subr.bf16.mxu0 0
        %800 = vmatpush2.bf16.msra.mxu0 %v675
        %801 = vmatprep.mubr.bf16.mxu0 %v360
        %802 = vmatmul.mubr.bf16.gmra.mxu0 %v359
        %v803 = vpop.f32.mrf.mxu0
        %v804 = vadd.f32 %v469, %v803
        %v805 = vpop.f32.mrf.mxu0
        %v806 = vpop.f32.mrf.mxu0
        %v807 = vadd.f32 %v469, %v806
        %v808 = vpop.f32.mrf.mxu0
        %809 = vdwg.mxu0
        %810 = vmatprep.subr.bf16.mxu0 0
        %811 = vmatpush1.bf16.msra.mxu0 %v690
        %812 = vmatprep.subr.bf16.mxu0 0
        %813 = vmatpush1.bf16.msra.mxu0 %v689
        %814 = vmatprep.subr.bf16.mxu0 0
        %815 = vmatpush1.bf16.msra.mxu0 %v688
        %816 = vmatprep.subr.bf16.mxu0 0
        %817 = vmatpush1.bf16.msra.mxu0 %v687
        %818 = vmatprep.subr.bf16.mxu0 0
        %819 = vmatpush1.bf16.msra.mxu0 %v686
        %820 = vmatprep.subr.bf16.mxu0 0
        %821 = vmatpush1.bf16.msra.mxu0 %v685
        %822 = vmatprep.subr.bf16.mxu0 0
        %823 = vmatpush1.bf16.msra.mxu0 %v684
        %824 = vmatprep.subr.bf16.mxu0 0
        %825 = vmatpush1.bf16.msra.mxu0 %v683
        %826 = vmatprep.subr.bf16.mxu0 0
        %827 = vmatpush2.bf16.msra.mxu0 %v698
        %828 = vmatprep.subr.bf16.mxu0 0
        %829 = vmatpush2.bf16.msra.mxu0 %v697
        %830 = vmatprep.subr.bf16.mxu0 0
        %831 = vmatpush2.bf16.msra.mxu0 %v696
        %832 = vmatprep.subr.bf16.mxu0 0
        %833 = vmatpush2.bf16.msra.mxu0 %v695
        %834 = vmatprep.subr.bf16.mxu0 0
        %835 = vmatpush2.bf16.msra.mxu0 %v694
        %836 = vmatprep.subr.bf16.mxu0 0
        %837 = vmatpush2.bf16.msra.mxu0 %v693
        %838 = vmatprep.subr.bf16.mxu0 0
        %839 = vmatpush2.bf16.msra.mxu0 %v692
        %840 = vmatprep.subr.bf16.mxu0 0
        %841 = vmatpush2.bf16.msra.mxu0 %v691
        %842 = vmatprep.mubr.bf16.mxu0 %v362
        %843 = vmatmul.mubr.bf16.gmra.mxu0 %v361
        %v844 = vpop.f32.mrf.mxu0
        %v845 = vadd.f32 %v804, %v844
        %v846 = vpop.f32.mrf.mxu0
        %v847 = vpop.f32.mrf.mxu0
        %v848 = vadd.f32 %v807, %v847
        %v849 = vpop.f32.mrf.mxu0
        %850 = vdwg.mxu0
        %851 = vmatprep.subr.bf16.mxu0 0
        %852 = vmatpush1.bf16.msra.mxu0 %v706
        %853 = vmatprep.subr.bf16.mxu0 0
        %854 = vmatpush1.bf16.msra.mxu0 %v705
        %855 = vmatprep.subr.bf16.mxu0 0
        %856 = vmatpush1.bf16.msra.mxu0 %v704
        %857 = vmatprep.subr.bf16.mxu0 0
        %858 = vmatpush1.bf16.msra.mxu0 %v703
        %859 = vmatprep.subr.bf16.mxu0 0
        %860 = vmatpush1.bf16.msra.mxu0 %v702
        %861 = vmatprep.subr.bf16.mxu0 0
        %862 = vmatpush1.bf16.msra.mxu0 %v701
        %863 = vmatprep.subr.bf16.mxu0 0
        %864 = vmatpush1.bf16.msra.mxu0 %v700
        %865 = vmatprep.subr.bf16.mxu0 0
        %866 = vmatpush1.bf16.msra.mxu0 %v699
        %867 = vmatprep.subr.bf16.mxu0 0
        %868 = vmatpush2.bf16.msra.mxu0 %v714
        %869 = vmatprep.subr.bf16.mxu0 0
        %870 = vmatpush2.bf16.msra.mxu0 %v713
        %871 = vmatprep.subr.bf16.mxu0 0
        %872 = vmatpush2.bf16.msra.mxu0 %v712
        %873 = vmatprep.subr.bf16.mxu0 0
        %874 = vmatpush2.bf16.msra.mxu0 %v711
        %875 = vmatprep.subr.bf16.mxu0 0
        %876 = vmatpush2.bf16.msra.mxu0 %v710
        %877 = vmatprep.subr.bf16.mxu0 0
        %878 = vmatpush2.bf16.msra.mxu0 %v709
        %879 = vmatprep.subr.bf16.mxu0 0
        %880 = vmatpush2.bf16.msra.mxu0 %v708
        %881 = vmatprep.subr.bf16.mxu0 0
        %882 = vmatpush2.bf16.msra.mxu0 %v707
        %883 = vmatprep.mubr.bf16.mxu0 %v364
        %884 = vmatmul.mubr.bf16.gmra.mxu0 %v363
        %v885 = vpop.f32.mrf.mxu0
        %v886 = vadd.f32 %v845, %v885
        %v887 = vpop.f32.mrf.mxu0
        %v888 = vpop.f32.mrf.mxu0
        %v889 = vadd.f32 %v848, %v888
        %v890 = vpop.f32.mrf.mxu0
        %891 = vdwg.mxu0
        %892 = vmatprep.subr.bf16.mxu0 0
        %893 = vmatpush1.bf16.msra.mxu0 0
        %894 = vmatprep.subr.bf16.mxu0 0
        %895 = vmatpush1.bf16.msra.mxu0 0
        %896 = vmatprep.subr.bf16.mxu0 0
        %897 = vmatpush1.bf16.msra.mxu0 0
        %898 = vmatprep.subr.bf16.mxu0 0
        %899 = vmatpush1.bf16.msra.mxu0 0
        %900 = vmatprep.subr.bf16.mxu0 0
        %901 = vmatpush1.bf16.msra.mxu0 0
        %902 = vmatprep.subr.bf16.mxu0 0
        %903 = vmatpush1.bf16.msra.mxu0 0
        %904 = vmatprep.subr.bf16.mxu0 0
        %905 = vmatpush1.bf16.msra.mxu0 0
        %906 = vmatprep.subr.bf16.mxu0 0
        %907 = vmatpush1.bf16.msra.mxu0 %v715
        %908 = vmatprep.subr.bf16.mxu0 0
        %909 = vmatpush2.bf16.msra.mxu0 0
        %910 = vmatprep.subr.bf16.mxu0 0
        %911 = vmatpush2.bf16.msra.mxu0 0
        %912 = vmatprep.subr.bf16.mxu0 0
        %913 = vmatpush2.bf16.msra.mxu0 0
        %914 = vmatprep.subr.bf16.mxu0 0
        %915 = vmatpush2.bf16.msra.mxu0 0
        %916 = vmatprep.subr.bf16.mxu0 0
        %917 = vmatpush2.bf16.msra.mxu0 0
        %918 = vmatprep.subr.bf16.mxu0 0
        %919 = vmatpush2.bf16.msra.mxu0 0
        %920 = vmatprep.subr.bf16.mxu0 0
        %921 = vmatpush2.bf16.msra.mxu0 0
        %922 = vmatprep.subr.bf16.mxu0 0
        %923 = vmatpush2.bf16.msra.mxu0 0
        %924 = vmatprep.mubr.bf16.mxu0 0
        %925 = vmatmul.mubr.bf16.gmra.mxu0 %v767
        %v926 = vpop.f32.mrf.mxu0
        %v927 = vadd.f32 %v886, %v926
        %v928 = vpop.f32.mrf.mxu0
        %v929 = vpop.f32.mrf.mxu0
        %v930 = vadd.f32 %v889, %v929
        %v931 = vpop.f32.mrf.mxu0
        %932 = vdwg.mxu0
        %v933 = vmax.f32 %v927, 0.0
        %v934 = vmax.f32 %v930, 0.0
        %v935 = vpack.c.bf16 %v934, %v933
        %v936 = vld [vmem:[#allocation7] sm:$0xf]
        %v937 = vld [vmem:[#allocation7 + $0x4] sm:$0xf]
        %v938 = vld [vmem:[#allocation7 + $0x8] sm:$0xf]
        %v939 = vld [vmem:[#allocation7 + $0xc] sm:$0xf]
        %v940 = vld [vmem:[#allocation7 + $0x10] sm:$0xf]
        %v941 = vld [vmem:[#allocation7 + $0x14] sm:$0xf]
        %v942 = vld [vmem:[#allocation7 + $0x18] sm:$0xf]
        %v943 = vld [vmem:[#allocation7 + $0x1c] sm:$0xf]
        %v944 = vld [vmem:[#allocation7 + $0x20] sm:$0xf]
        %v945 = vld [vmem:[#allocation7 + $0x24] sm:$0xf]
        %v946 = vld [vmem:[#allocation7 + $0x28] sm:$0xf]
        %v947 = vld [vmem:[#allocation7 + $0x2c] sm:$0xf]
        %v948 = vld [vmem:[#allocation7 + $0x30] sm:$0xf]
        %v949 = vld [vmem:[#allocation7 + $0x34] sm:$0xf]
        %v950 = vld [vmem:[#allocation7 + $0x38] sm:$0xf]
        %v951 = vld [vmem:[#allocation7 + $0x3c] sm:$0xf]
        %v952 = vld [vmem:[%s4] sm:$0x1]
        %v954 = vlaneseq
        %v955 = vshrl.u32 %v954, 7
        %v956 = vsub.s32 0, %v955
        %v957 = vrot.slane %v952, %v956
        %v975 = vunpack.c.l.b16 %v936
        %v976 = vunpack.c.l.b16 %v937
        %v977 = vunpack.c.l.b16 %v938
        %v978 = vunpack.c.l.b16 %v939
        %v979 = vunpack.c.l.b16 %v940
        %v980 = vunpack.c.l.b16 %v941
        %v981 = vunpack.c.l.b16 %v942
        %v982 = vunpack.c.l.b16 %v943
        %v983 = vunpack.c.l.b16 %v944
        %v984 = vunpack.c.l.b16 %v945
        %v985 = vunpack.c.l.b16 %v946
        %v986 = vunpack.c.l.b16 %v947
        %v987 = vunpack.c.l.b16 %v948
        %v988 = vunpack.c.l.b16 %v949
        %v989 = vunpack.c.l.b16 %v950
        %v990 = vunpack.c.l.b16 %v951
        %v991 = vpack.c.b16 %v976, %v975
        %v992 = vpack.c.b16 %v978, %v977
        %v993 = vpack.c.b16 %v980, %v979
        %v994 = vpack.c.b16 %v982, %v981
        %v995 = vpack.c.b16 %v984, %v983
        %v996 = vpack.c.b16 %v986, %v985
        %v997 = vpack.c.b16 %v988, %v987
        %v998 = vpack.c.b16 %v990, %v989
        %1007 = vmatprep.subr.bf16.mxu0 0
        %1008 = vmatpush1.bf16.msra.mxu0 %v998
        %1009 = vmatprep.subr.bf16.mxu0 0
        %1010 = vmatpush1.bf16.msra.mxu0 %v997
        %1011 = vmatprep.subr.bf16.mxu0 0
        %1012 = vmatpush1.bf16.msra.mxu0 %v996
        %1013 = vmatprep.subr.bf16.mxu0 0
        %1014 = vmatpush1.bf16.msra.mxu0 %v995
        %1015 = vmatprep.subr.bf16.mxu0 0
        %1016 = vmatpush1.bf16.msra.mxu0 %v994
        %1017 = vmatprep.subr.bf16.mxu0 0
        %1018 = vmatpush1.bf16.msra.mxu0 %v993
        %1019 = vmatprep.subr.bf16.mxu0 0
        %1020 = vmatpush1.bf16.msra.mxu0 %v992
        %1021 = vmatprep.subr.bf16.mxu0 0
        %1022 = vmatpush1.bf16.msra.mxu0 %v991
        %1023 = vmatprep.subr.bf16.mxu0 0
        %1024 = vmatpush2.bf16.msra.mxu0 0
        %1025 = vmatprep.subr.bf16.mxu0 0
        %1026 = vmatpush2.bf16.msra.mxu0 0
        %1027 = vmatprep.subr.bf16.mxu0 0
        %1028 = vmatpush2.bf16.msra.mxu0 0
        %1029 = vmatprep.subr.bf16.mxu0 0
        %1030 = vmatpush2.bf16.msra.mxu0 0
        %1031 = vmatprep.subr.bf16.mxu0 0
        %1032 = vmatpush2.bf16.msra.mxu0 0
        %1033 = vmatprep.subr.bf16.mxu0 0
        %1034 = vmatpush2.bf16.msra.mxu0 0
        %1035 = vmatprep.subr.bf16.mxu0 0
        %1036 = vmatpush2.bf16.msra.mxu0 0
        %1037 = vmatprep.subr.bf16.mxu0 0
        %1038 = vmatpush2.bf16.msra.mxu0 0
        %1039 = vmatprep.mubr.bf16.mxu0 0
        %1040 = vmatmul.mubr.bf16.gmra.mxu0 %v935
        %v1041 = vpop.f32.mrf.mxu0
        %v1042 = vadd.f32 %v957, %v1041
        %v1043 = vpop.f32.mrf.mxu0
        %v1044 = vpop.f32.mrf.mxu0
        %v1045 = vadd.f32 %v957, %v1044
        %v1046 = vpop.f32.mrf.mxu0
        %1047 = vdwg.mxu0
        %v1048 = vmax.f32 %v1042, 0.0
        %v1049 = vmax.f32 %v1045, 0.0
        %v1050 = vpack.c.bf16 %v1049, %v1048
        %v1051 = vld [vmem:[#allocation8] sm:$0xf]
        %v1052 = vld [vmem:[#allocation8 + $0x4] sm:$0xf]
        %v1053 = vld [vmem:[#allocation8 + $0x8] sm:$0xf]
        %v1054 = vld [vmem:[#allocation8 + $0xc] sm:$0xf]
        %v1055 = vld [vmem:[#allocation8 + $0x10] sm:$0xf]
        %v1056 = vld [vmem:[#allocation8 + $0x14] sm:$0xf]
        %v1057 = vld [vmem:[#allocation8 + $0x18] sm:$0xf]
        %v1058 = vld [vmem:[#allocation8 + $0x1c] sm:$0xf]
        %v1059 = vld [vmem:[#allocation8 + $0x20] sm:$0xf]
        %v1060 = vld [vmem:[#allocation8 + $0x24] sm:$0xf]
        %v1061 = vld [vmem:[#allocation8 + $0x28] sm:$0xf]
        %v1062 = vld [vmem:[#allocation8 + $0x2c] sm:$0xf]
        %v1063 = vld [vmem:[#allocation8 + $0x30] sm:$0xf]
        %v1064 = vld [vmem:[#allocation8 + $0x34] sm:$0xf]
        %v1065 = vld [vmem:[#allocation8 + $0x38] sm:$0xf]
        %v1066 = vld [vmem:[#allocation8 + $0x3c] sm:$0xf]
        %v1067 = vld [vmem:[%s6] sm:$0x1]
        %v1069 = vlaneseq
        %v1070 = vshrl.u32 %v1069, 7
        %v1071 = vsub.s32 0, %v1070
        %v1072 = vrot.slane %v1067, %v1071
        %v1090 = vunpack.c.l.b16 %v1051
        %v1091 = vunpack.c.l.b16 %v1052
        %v1092 = vunpack.c.l.b16 %v1053
        %v1093 = vunpack.c.l.b16 %v1054
        %v1094 = vunpack.c.l.b16 %v1055
        %v1095 = vunpack.c.l.b16 %v1056
        %v1096 = vunpack.c.l.b16 %v1057
        %v1097 = vunpack.c.l.b16 %v1058
        %v1098 = vunpack.c.l.b16 %v1059
        %v1099 = vunpack.c.l.b16 %v1060
        %v1100 = vunpack.c.l.b16 %v1061
        %v1101 = vunpack.c.l.b16 %v1062
        %v1102 = vunpack.c.l.b16 %v1063
        %v1103 = vunpack.c.l.b16 %v1064
        %v1104 = vunpack.c.l.b16 %v1065
        %v1105 = vunpack.c.l.b16 %v1066
        %v1106 = vpack.c.b16 %v1091, %v1090
        %v1107 = vpack.c.b16 %v1093, %v1092
        %v1108 = vpack.c.b16 %v1095, %v1094
        %v1109 = vpack.c.b16 %v1097, %v1096
        %v1110 = vpack.c.b16 %v1099, %v1098
        %v1111 = vpack.c.b16 %v1101, %v1100
        %v1112 = vpack.c.b16 %v1103, %v1102
        %v1113 = vpack.c.b16 %v1105, %v1104
        %1122 = vmatprep.subr.bf16.mxu0 0
        %1123 = vmatpush1.bf16.msra.mxu0 %v1113
        %1124 = vmatprep.subr.bf16.mxu0 0
        %1125 = vmatpush1.bf16.msra.mxu0 %v1112
        %1126 = vmatprep.subr.bf16.mxu0 0
        %1127 = vmatpush1.bf16.msra.mxu0 %v1111
        %1128 = vmatprep.subr.bf16.mxu0 0
        %1129 = vmatpush1.bf16.msra.mxu0 %v1110
        %1130 = vmatprep.subr.bf16.mxu0 0
        %1131 = vmatpush1.bf16.msra.mxu0 %v1109
        %1132 = vmatprep.subr.bf16.mxu0 0
        %1133 = vmatpush1.bf16.msra.mxu0 %v1108
        %1134 = vmatprep.subr.bf16.mxu0 0
        %1135 = vmatpush1.bf16.msra.mxu0 %v1107
        %1136 = vmatprep.subr.bf16.mxu0 0
        %1137 = vmatpush1.bf16.msra.mxu0 %v1106
        %1138 = vmatprep.subr.bf16.mxu0 0
        %1139 = vmatpush2.bf16.msra.mxu0 0
        %1140 = vmatprep.subr.bf16.mxu0 0
        %1141 = vmatpush2.bf16.msra.mxu0 0
        %1142 = vmatprep.subr.bf16.mxu0 0
        %1143 = vmatpush2.bf16.msra.mxu0 0
        %1144 = vmatprep.subr.bf16.mxu0 0
        %1145 = vmatpush2.bf16.msra.mxu0 0
        %1146 = vmatprep.subr.bf16.mxu0 0
        %1147 = vmatpush2.bf16.msra.mxu0 0
        %1148 = vmatprep.subr.bf16.mxu0 0
        %1149 = vmatpush2.bf16.msra.mxu0 0
        %1150 = vmatprep.subr.bf16.mxu0 0
        %1151 = vmatpush2.bf16.msra.mxu0 0
        %1152 = vmatprep.subr.bf16.mxu0 0
        %1153 = vmatpush2.bf16.msra.mxu0 0
        %1154 = vmatprep.mubr.bf16.mxu0 0
        %1155 = vmatmul.mubr.bf16.gmra.mxu0 %v1050
        %v1156 = vpop.f32.mrf.mxu0
        %v1157 = vadd.f32 %v1072, %v1156
        %v1158 = vpop.f32.mrf.mxu0
        %v1159 = vpop.f32.mrf.mxu0
        %v1160 = vadd.f32 %v1072, %v1159
        %v1161 = vpop.f32.mrf.mxu0
        %1162 = vdwg.mxu0
        %v1163 = vpack.c.bf16 %v1160, %v1157
        %v1165 = vunpack.c.l.b16 %v1163
        %v1166 = vunpack.c.h.b16 %v1163
        %v1167 = vpack.c.b16 %v1165, %v1165
        %v1168 = vpack.c.b16 %v1166, %v1166
        %1171 = vst [vmem:[%s341] sm:$0xf] %v1167
        %1172 = vst [vmem:[%s341 + $0x4] sm:$0xf] %v1168
        %s1173 = sand.u32 %s186, 1
        %s1174 = scalar_lea.sflag [#allocation4], %s1173
        %s1175 = sand.u32 %s186, 1
        %s1176 = smul.addr %s1175, 8
        %s1177 = scalar_lea.vmem [#allocation10], %s1176
        // Predicated region
        $region65: #{tpu_custom_call.1} parent=47 // pred_check
          %p1178 = pneg %p196
        $region66: #{tpu_custom_call.1} parent=47 // pred_check_branch
          %1180 = sbr.rel (%p1178) target = $region68
        $region67: #{tpu_custom_call.1} parent=47 // pred_region
          %s1181 = smul.u32 2, %s26
          %s1183 = ssub.s32 128, 128
          %1184 = vsyncadd %s1174, %s1183
          %s1185 = smul.addr %s1181, 64
          %s1186 = scalar_lea.hbm %s7, %s1185
          %s1187 = sshll.u32 %s1177, 4
          %s1188 = int_to_ptr.vmem [resolvable:$true] %s1187
          %1193 = dma.vmem_to_hbm [thread:$0]  %s1188, 128, %s1186, %s1174, 64, 64, 4
        $region68: #{tpu_custom_call.1} parent=47 // pred_fallthru
          _
      $region48: #{tpu_custom_call.1} parent=5 // pred_fallthru
        _
      %p1194 = scmp.le.s32.totalorder 2, %s21
      // Predicated region
      $region69: #{tpu_custom_call.1} parent=5 // pred_check
        %p1195 = pneg %p1194
      $region70: #{tpu_custom_call.1} parent=5 // pred_check_branch
        %1197 = sbr.rel (%p1195) target = $region72
      $region71: #{tpu_custom_call.1} parent=5 // pred_region
        %s1198 = ssub.s32 %s21, 2
        // Predicated region
        $region73: #{tpu_custom_call.1} parent=71 // pred_check
          %p1199 = pneg %p202
        $region74: #{tpu_custom_call.1} parent=71 // pred_check_branch
          %1201 = sbr.rel (%p1199) target = $region76
        $region75: #{tpu_custom_call.1} parent=71 // pred_region
          %s1202 = sand.u32 %s187, 1
          %s1203 = scalar_lea.sflag [#allocation4], %s1202
          %s1204 = sand.u32 %s187, 1
          %s1205 = smul.addr %s1204, 8
          %s1206 = scalar_lea.vmem [#allocation10], %s1205
          %1207 = dma.done %s1203, 128
        $region76: #{tpu_custom_call.1} parent=71 // pred_fallthru
          _
      $region72: #{tpu_custom_call.1} parent=5 // pred_fallthru
        _
    $region6: #{tpu_custom_call.1} parent=1 // loop_footer
      %s25 = sadd.s32 1, %s21
    $region7: #{tpu_custom_call.1} parent=1 // loop_footer_branch
      %20 = sbr.rel target = $region3
    $region8: #{tpu_custom_call.1} parent=1 // loop_exit
      _
    %1208 = vsyncpa [#allocation3], 1
    %s1209 = scalar_lea.sflag [#allocation3], 1
    %1210 = vsyncpa %s1209, 1
    %1211 = vsyncpa [#allocation6], 1
    %1212 = vsyncpa [#allocation9], 1
    %1213 = vsyncpa [#allocation4], 1
    %s1214 = scalar_lea.sflag [#allocation4], 1
    %1215 = vsyncpa %s1214, 1

</llo_original>
